<compile_context>
chip_gen: v7x
topology: tpu7x:2x2x1
jax: 0.10.0
libtpu: 0.0.40
codegen_flags: <defaults>
</compile_context>

<pallas_src>
import jax
import jax.numpy as jnp
from jax.experimental import pallas as pl
from jax.experimental.pallas import tpu as pltpu

_LANE = 128


def _fusion_branch_kernel(g_ref, l_ref, wt_ref, b_ref, o_ref):
    # Elementwise fusion (VPU), matmul (MXU, f32 accumulate),
    # bias add + sigmoid (VPU/EUP) -- all on one (TB, O) tile.
    fusion = (g_ref[...] + l_ref[...]).astype(wt_ref.dtype)          # (TB, D)
    y = jnp.dot(fusion, wt_ref[...],
                preferred_element_type=jnp.float32)                  # (TB, O)
    y = y + b_ref[...]                                               # broadcast (1, O)
    o_ref[...] = jax.nn.sigmoid(y).astype(o_ref.dtype)


def prepare_fusion_params(weight, bias, param_dtype=None, pad_lanes=False):
    """One-time parameter prep (do NOT call per step).

    weight: (O, D) as in nn.Linear; bias: (O,).
    Returns (wt, b2) with wt: (D, O_eff), b2: (1, O_eff) f32.
    pad_lanes=True pads O up to a multiple of 128 (use only when O is large
    enough that lane-dense stores beat the extra writeback).
    param_dtype=jnp.bfloat16 enables the bf16 MXU path on v6e/v7x.
    """
    O, D = weight.shape
    wt = weight.T                                                    # (D, O)
    b = bias
    if pad_lanes:
        O_pad = ((O + _LANE - 1) // _LANE) * _LANE
        if O_pad != O:
            wt = jnp.pad(wt, ((0, 0), (0, O_pad - O)))
            b = jnp.pad(b, (0, O_pad - O))
    if param_dtype is not None:
        wt = wt.astype(param_dtype)
    b2 = b.reshape(1, -1).astype(jnp.float32)
    return wt, b2


def _resident_spec(shape):
    # Constant index_map -> block stays VMEM-resident across all grid steps.
    # Single-buffer it (Buffered(1)): the second pipeline buffer for a
    # never-changing block is wasted VMEM at real parameter sizes.
    idx = lambda i: (0,) * len(shape)
    try:
        return pl.BlockSpec(shape, idx, pipeline_mode=pl.Buffered(1))
    except TypeError:  # older jax without pipeline_mode on BlockSpec
        return pl.BlockSpec(shape, idx)


def fusion_branch(global_pool, local_pool, wt, b2, out_features, tile_b=1024):
    """global_pool, local_pool: (B, D); wt: (D, O_eff); b2: (1, O_eff)."""
    B, D = global_pool.shape
    D_w, O_eff = wt.shape
    assert D_w == D, "weight/input feature mismatch"

    # Batch tile selection:
    #   * whole batch in one grid step when it fits the tile budget
    #     (removes all per-step grid overhead), else
    #   * a large multiple-of-8 tile so each pool DMA is big and the
    #     ~0.35 us/step overhead is amortized.
    if B <= tile_b:
        TB = B
    else:
        TB = max(8, (min(tile_b, B) // 8) * 8)
    grid = (pl.cdiv(B, TB),)

    # Only let the grid shard across TensorCores when there is more than one
    # tile of work; a single tiny tile split across cores just duplicates DMA.
    semantics = ("parallel",) if grid[0] > 1 else ("arbitrary",)

    out = pl.pallas_call(
        _fusion_branch_kernel,
        out_shape=jax.ShapeDtypeStruct((B, O_eff), global_pool.dtype),
        grid_spec=pltpu.PrefetchScalarGridSpec(
            num_scalar_prefetch=0,
            grid=grid,
            in_specs=[
                pl.BlockSpec((TB, D), lambda i: (i, 0)),     # global pool tile i
                pl.BlockSpec((TB, D), lambda i: (i, 0)),     # local  pool tile i
                _resident_spec((D, O_eff)),                  # weight: VMEM-resident
                _resident_spec((1, O_eff)),                  # bias:   VMEM-resident
            ],
            out_specs=pl.BlockSpec((TB, O_eff), lambda i: (i, 0)),
        ),
        compiler_params=pltpu.CompilerParams(dimension_semantics=semantics),
    )(global_pool, local_pool, wt, b2)

    if O_eff != out_features:                                # only when lane-padded
        out = out[:, :out_features]
    return out


if __name__ == "__main__":
    # Small shapes consistent with the module: pooled features of size 32
    # fused and projected to 16 classes, batch 16.  With tile_b>=B this runs
    # as a single grid step (no per-step overhead) and an unpadded (16,16)
    # output (no 8x writeback, no external slice).
    B, input_size, output_size = 16, 32, 16

    key = jax.random.PRNGKey(0)
    kg, kl, kw, kb = jax.random.split(key, 4)

    global_pool = jax.random.normal(kg, (B, input_size), dtype=jnp.float32)
    local_pool = jax.random.normal(kl, (B, input_size), dtype=jnp.float32)

    # Deterministic parameter init (mimics nn.Linear uniform(-1/sqrt(D), 1/sqrt(D))).
    bound = 1.0 / jnp.sqrt(jnp.float32(input_size))
    weight = jax.random.uniform(kw, (output_size, input_size),
                                dtype=jnp.float32, minval=-bound, maxval=bound)
    bias = jax.random.uniform(kb, (output_size,),
                              dtype=jnp.float32, minval=-bound, maxval=bound)

    # One-time parameter preparation (transpose; no lane padding at O=16).
    # f32 MXU path here for tight tolerance; pass param_dtype=jnp.bfloat16 on
    # v6e/v7x at real sizes (then loosen the tolerance accordingly).
    wt, b2 = prepare_fusion_params(weight, bias, param_dtype=None, pad_lanes=False)

    out = fusion_branch(global_pool, local_pool, wt, b2,
                        out_features=output_size)
    out = jax.block_until_ready(out)

    # Reference check in plain JAX.
    ref = jax.nn.sigmoid((global_pool + local_pool) @ weight.T + bias)
    assert out.shape == (B, output_size)
    assert jnp.allclose(out, ref, atol=1e-5, rtol=1e-5)

    print("KERNEL_OK")
</pallas_src>

<mosaic_0001>
module attributes {stable_mosaic.version = 11 : i64} {
  func.func @_fusion_branch_kernel(%arg0: i32, %arg1: memref<16x32xf32, #tpu.memory_space<vmem>>, %arg2: memref<16x32xf32, #tpu.memory_space<vmem>>, %arg3: memref<32x16xf32, #tpu.memory_space<vmem>>, %arg4: memref<1x16xf32, #tpu.memory_space<vmem>>, %arg5: memref<16x16xf32, #tpu.memory_space<vmem>>) attributes {dimension_semantics = [#tpu.dimension_semantics<arbitrary>], iteration_bounds = array<i64: 1>, scalar_prefetch = 0 : i64, scratch_operands = 0 : i64, tpu.core_type = #tpu.core_type<tc>, window_params = [{transform_indices = @transform_0, window_bounds = array<i64: 16, 32>}, {transform_indices = @transform_1, window_bounds = array<i64: 16, 32>}, {pipeline_mode = #tpu.pipeline_mode<synchronous>, transform_indices = @transform_2, window_bounds = array<i64: 32, 16>}, {pipeline_mode = #tpu.pipeline_mode<synchronous>, transform_indices = @transform_3, window_bounds = array<i64: 1, 16>}, {transform_indices = @transform_4, window_bounds = array<i64: 16, 16>}]} {
    %c0 = arith.constant 0 : index
    %c0_0 = arith.constant 0 : index
    %0 = vector.load %arg1[%c0, %c0_0] : memref<16x32xf32, #tpu.memory_space<vmem>>, vector<16x32xf32>
    %c0_1 = arith.constant 0 : index
    %c0_2 = arith.constant 0 : index
    %1 = vector.load %arg2[%c0_1, %c0_2] : memref<16x32xf32, #tpu.memory_space<vmem>>, vector<16x32xf32>
    %2 = arith.addf %0, %1 : vector<16x32xf32>
    %c0_3 = arith.constant 0 : index
    %c0_4 = arith.constant 0 : index
    %3 = vector.load %arg3[%c0_3, %c0_4] : memref<32x16xf32, #tpu.memory_space<vmem>>, vector<32x16xf32>
    %cst = arith.constant dense<0.000000e+00> : vector<16x16xf32>
    %4 = tpu.matmul %2, %3, %cst {dimension_numbers = #tpu.dot_dimension_numbers<[1], [0], [0], [1], [0, 0, 1, 1], [], []>} : vector<16x32xf32>, vector<32x16xf32>, vector<16x16xf32> -> vector<16x16xf32>
    %c0_5 = arith.constant 0 : index
    %c0_6 = arith.constant 0 : index
    %5 = vector.load %arg4[%c0_5, %c0_6] : memref<1x16xf32, #tpu.memory_space<vmem>>, vector<1x16xf32>
    %6 = vector.broadcast %5 : vector<1x16xf32> to vector<16x16xf32>
    %7 = arith.addf %4, %6 : vector<16x16xf32>
    %8 = arith.negf %7 : vector<16x16xf32>
    %9 = math.exp %8 : vector<16x16xf32>
    %cst_7 = arith.constant 1.000000e+00 : f32
    %10 = vector.broadcast %cst_7 : f32 to vector<16x16xf32>
    %11 = arith.addf %10, %9 : vector<16x16xf32>
    %12 = arith.divf %10, %11 : vector<16x16xf32>
    %c0_8 = arith.constant 0 : index
    %c0_9 = arith.constant 0 : index
    %13 = vector.load %arg5[%c0_8, %c0_9] : memref<16x16xf32, #tpu.memory_space<vmem>>, vector<16x16xf32>
    tpu.vector_store %arg5[%c0_8, %c0_9], %12 {strides = array<i32>} : memref<16x16xf32, #tpu.memory_space<vmem>>, vector<16x16xf32>,
    return
  }
  func.func @transform_0(%arg0: i32) -> (i32, i32) {
    %c0_i32 = arith.constant 0 : i32
    %c0_i32_0 = arith.constant 0 : i32
    return %arg0, %c0_i32 : i32, i32
  }
  func.func @transform_1(%arg0: i32) -> (i32, i32) {
    %c0_i32 = arith.constant 0 : i32
    %c0_i32_0 = arith.constant 0 : i32
    return %arg0, %c0_i32 : i32, i32
  }
  func.func @transform_2(%arg0: i32) -> (i32, i32) {
    %c0_i32 = arith.constant 0 : i32
    %c0_i32_0 = arith.constant 0 : i32
    %c0_i32_1 = arith.constant 0 : i32
    return %c0_i32, %c0_i32_0 : i32, i32
  }
  func.func @transform_3(%arg0: i32) -> (i32, i32) {
    %c0_i32 = arith.constant 0 : i32
    %c0_i32_0 = arith.constant 0 : i32
    %c0_i32_1 = arith.constant 0 : i32
    return %c0_i32, %c0_i32_0 : i32, i32
  }
  func.func @transform_4(%arg0: i32) -> (i32, i32) {
    %c0_i32 = arith.constant 0 : i32
    %c0_i32_0 = arith.constant 0 : i32
    return %arg0, %c0_i32 : i32, i32
  }
}

</mosaic_0001>

<llo_original>
// kernel: tpu_custom_call.1
$region0: #{tpu_custom_call.1}
  #allocation0 [shape = 'u32[]', space=smem, size = 0x4, offset = 0x4, fixed_abs, tag = 'smem constant byte address 0x4 - core index']
  #allocation1 [shape = 'u32[144,128]{1,0:T(1,128)}', space=vmem, size = 0x12000, scoped, tag = 'internal scratch']
  %s0 = inlined_call_operand.vmem [shape: f32[16,32], index: 0, kind: input, shape index: {}]
  %s1 = inlined_call_operand.vmem [shape: f32[16,32], index: 1, kind: input, shape index: {}]
  %s2 = inlined_call_operand.vmem [shape: f32[32,16], index: 2, kind: input, shape index: {}]
  %s3 = inlined_call_operand.vmem [shape: f32[1,16], index: 3, kind: input, shape index: {}]
  %s4 = inlined_call_operand.hbm [shape: f32[16,16], index: 4, kind: output, shape index: {}]
  %s5 = sld [smem:[#allocation0]]
  $region26: #{tpu_custom_call.1} parent=0
    _
  %s7 = ssub.s32 1, %s5
  %s8 = scalar_select 0, %s7, %s5
  $region1: #{tpu_custom_call.1} parent=0
    #allocation2 [shape = 'u8[8192]{0}', space=vmem, size = 0x2000, scoped, tag = 'output window, operand 0, single buffered']
    #allocation3 [shape = 's32[1]{0}', space=sflag, size = 0x4, scoped, tag = 'scoped memory for tpu_custom_call.1']
    %9 = vsyncpa [#allocation3], 0
    // Predicated region
    $region2: #{tpu_custom_call.1} parent=1 // pred_check
      _
    $region3: #{tpu_custom_call.1} parent=1 // pred_check_branch
      %11 = sbr.rel (0) target = $region5
    $region4: #{tpu_custom_call.1} parent=1 // pred_region
      _
    $region5: #{tpu_custom_call.1} parent=1 // pred_fallthru
      _
    // Predicated region
    $region6: #{tpu_custom_call.1} parent=1 // pred_check
      _
    $region7: #{tpu_custom_call.1} parent=1 // pred_check_branch
      %13 = sbr.rel (0) target = $region9
    $region8: #{tpu_custom_call.1} parent=1 // pred_region
      _
    $region9: #{tpu_custom_call.1} parent=1 // pred_fallthru
      _
    // Predicated region
    $region10: #{tpu_custom_call.1} parent=1 // pred_check
      _
    $region11: #{tpu_custom_call.1} parent=1 // pred_check_branch
      %15 = sbr.rel (0) target = $region13
    $region12: #{tpu_custom_call.1} parent=1 // pred_region
      _
    $region13: #{tpu_custom_call.1} parent=1 // pred_fallthru
      _
    // Predicated region
    $region14: #{tpu_custom_call.1} parent=1 // pred_check
      _
    $region15: #{tpu_custom_call.1} parent=1 // pred_check_branch
      %17 = sbr.rel (0) target = $region17
    $region16: #{tpu_custom_call.1} parent=1 // pred_region
      _
    $region17: #{tpu_custom_call.1} parent=1 // pred_fallthru
      _
    %v18 = vld [vmem:[%s0] sm:$0xff]
    %v19 = vld [vmem:[%s0 + $0x8] sm:$0xff]
    %v20 = vld [vmem:[%s1] sm:$0xff]
    %v21 = vld [vmem:[%s1 + $0x8] sm:$0xff]
    %v22 = vadd.f32 %v18, %v20
    %v23 = vadd.f32 %v19, %v21
    %v24 = vld [vmem:[%s2] sm:$0xff]
    %v25 = vld [vmem:[%s2 + $0x8] sm:$0xff]
    %v26 = vld [vmem:[%s2 + $0x10] sm:$0xff]
    %v27 = vld [vmem:[%s2 + $0x18] sm:$0xff]
    %v28 = vld [vmem:[%s3] sm:$0x1]
    %v30 = vlaneseq
    %v31 = vshrl.u32 %v30, 7
    %v32 = vsub.s32 0, %v31
    %v33 = vrot.slane %v28, %v32
    %vm35 = vcmask 261120
    %v37 = vsel %vm35, %v22, 0
    %v40 = vsel %vm35, %v23, 0
    %42 = vmatprep.subr.mxu0 0.0
    %43 = vmatpush1.msra.mxu0 %v24
    %44 = vmatprep.subr.mxu0 0.0
    %45 = vmatpush1.msra.mxu0 %v25
    %46 = vmatprep.subr.mxu0 0.0
    %47 = vmatpush1.msra.mxu0 %v26
    %48 = vmatprep.subr.mxu0 0.0
    %49 = vmatpush1.msra.mxu0 %v27
    %50 = vmatprep.subr.mxu0 0.0
    %51 = vmatpush1.msra.mxu0 0.0
    %52 = vmatprep.subr.mxu0 0.0
    %53 = vmatpush1.msra.mxu0 0.0
    %54 = vmatprep.subr.mxu0 0.0
    %55 = vmatpush1.msra.mxu0 0.0
    %56 = vmatprep.subr.mxu0 0.0
    %57 = vmatpush1.msra.mxu0 0.0
    %58 = vmatprep.subr.mxu0 0.0
    %59 = vmatpush1.msra.mxu0 0.0
    %60 = vmatprep.subr.mxu0 0.0
    %61 = vmatpush1.msra.mxu0 0.0
    %62 = vmatprep.subr.mxu0 0.0
    %63 = vmatpush1.msra.mxu0 0.0
    %64 = vmatprep.subr.mxu0 0.0
    %65 = vmatpush1.msra.mxu0 0.0
    %66 = vmatprep.subr.mxu0 0.0
    %67 = vmatpush1.msra.mxu0 0.0
    %68 = vmatprep.subr.mxu0 0.0
    %69 = vmatpush1.msra.mxu0 0.0
    %70 = vmatprep.subr.mxu0 0.0
    %71 = vmatpush1.msra.mxu0 0.0
    %72 = vmatprep.subr.mxu0 0.0
    %73 = vmatpush1.msra.mxu0 0.0
    %74 = vmatprep.subr.mxu0 0.0
    %75 = vmatpush1.msra.mxu0 0.0
    %76 = vmatprep.subr.mxu0 0.0
    %77 = vmatpush1.msra.mxu0 0.0
    %78 = vmatprep.subr.mxu0 0.0
    %79 = vmatpush1.msra.mxu0 0.0
    %80 = vmatprep.subr.mxu0 0.0
    %81 = vmatpush1.msra.mxu0 0.0
    %82 = vmatprep.subr.mxu0 0.0
    %83 = vmatpush1.msra.mxu0 0.0
    %84 = vmatprep.subr.mxu0 0.0
    %85 = vmatpush1.msra.mxu0 0.0
    %86 = vmatprep.subr.mxu0 0.0
    %87 = vmatpush1.msra.mxu0 0.0
    %88 = vmatprep.subr.mxu0 0.0
    %89 = vmatpush1.msra.mxu0 0.0
    %90 = vmatprep.subr.mxu0 0.0
    %91 = vmatpush1.msra.mxu0 0.0
    %92 = vmatprep.subr.mxu0 0.0
    %93 = vmatpush1.msra.mxu0 0.0
    %94 = vmatprep.subr.mxu0 0.0
    %95 = vmatpush1.msra.mxu0 0.0
    %96 = vmatprep.subr.mxu0 0.0
    %97 = vmatpush1.msra.mxu0 0.0
    %98 = vmatprep.subr.mxu0 0.0
    %99 = vmatpush1.msra.mxu0 0.0
    %100 = vmatprep.subr.mxu0 0.0
    %101 = vmatpush1.msra.mxu0 0.0
    %102 = vmatprep.subr.mxu0 0.0
    %103 = vmatpush1.msra.mxu0 0.0
    %104 = vmatprep.subr.mxu0 0.0
    %105 = vmatpush1.msra.mxu0 0.0
    %106 = vmatprep.mubr.f32.mxu0 0.0
    %107 = vmatmul.mubr.f32.gmra.mrb[0].mxu0 %v37
    %v108 = vpop.f32.mrb[0].mxu0
    %v109 = vadd.f32 %v33, %v108
    %v110 = vpop.f32.mrb[0].mxu0
    %111 = vmatprep.mubr.f32.mxu0 0.0
    %112 = vmatmul.mubr.f32.gmra.mrb[0].mxu0 %v40
    %v113 = vpop.f32.mrb[0].mxu0
    %v114 = vadd.f32 %v33, %v113
    %v115 = vpop.f32.mrb[0].mxu0
    %116 = vdwg.mxu0
    %v117 = vxor.u32 %v109, 2147483648
    %v118 = vxor.u32 %v114, 2147483648
    %v119 = vmul.f32 %v117, 1.442695
    %v120 = vpow.pop %v119
    %v121 = vmul.f32 %v118, 1.442695
    %v122 = vpow.pop %v121
    %v123 = vadd.f32 %v120, 1.0
    %v124 = vadd.f32 %v122, 1.0
    %v125 = vrcp.pop %v123
    %v126 = vmul.f32 1.0, %v125
    %v127 = vrcp.pop %v124
    %v128 = vmul.f32 1.0, %v127
    %vm129 = vcmask 130048
    %130 = vst.msk [vmem:[#allocation2] sm:$0xff] %vm129, %v126
    %131 = vst.msk [vmem:[#allocation2 + $0x8] sm:$0xff] %vm129, %v128
    // Predicated region
    $region18: #{tpu_custom_call.1} parent=1 // pred_check
      _
    $region19: #{tpu_custom_call.1} parent=1 // pred_check_branch
      %133 = sbr.rel (0) target = $region21
    $region20: #{tpu_custom_call.1} parent=1 // pred_region
      %s135 = ssub.s32 256, 256
      %136 = vsyncadd [#allocation3], %s135
      %s137 = sshll.u32 [#allocation2], 4
      %s138 = int_to_ptr.vmem [resolvable:$true] %s137
      %143 = dma.vmem_to_hbm [thread:$0]  %s138, 256, %s4, [#allocation3], 128, 128, 8
    $region21: #{tpu_custom_call.1} parent=1 // pred_fallthru
      _
    // Predicated region
    $region22: #{tpu_custom_call.1} parent=1 // pred_check
      _
    $region23: #{tpu_custom_call.1} parent=1 // pred_check_branch
      %145 = sbr.rel (0) target = $region25
    $region24: #{tpu_custom_call.1} parent=1 // pred_region
      %146 = dma.done [#allocation3], 256
    $region25: #{tpu_custom_call.1} parent=1 // pred_fallthru
      _
    %147 = vsyncpa [#allocation3], 1

</llo_original>
